<compile_context>
chip_gen: v5e
topology: v5e:2x2
jax: 0.10.0
libtpu: 0.0.40
codegen_flags: <defaults>
</compile_context>

<pallas_src>
import functools

import jax
import jax.numpy as jnp
from jax import lax
from jax.experimental import pallas as pl
from jax.experimental.pallas import tpu as pltpu

EPS = 1e-5
_LANE = 128
_SUB = 8


def _dice_kernel(pred_ref, tgt_ref, inter_ref, psum_ref, *,
                 nclass, h_total, th, need_mask):
    """One grid step: a (N, C, th, W) slab of logits and the matching
    (N, th, W) slab of integer labels -> this tile's partial
    sum(sigmoid(p) * onehot) and sum(sigmoid(p)), broadcast into lane-dense
    (1, 8, 128) output blocks."""
    x = pred_ref[...].astype(jnp.float32)                  # cast in-register
    # sigmoid(x) == 0.5 * (tanh(x/2) + 1): one EUP push + two VALU ops.
    pre = 0.5 * (jnp.tanh(0.5 * x) + 1.0)                  # (N, C, th, W)

    if need_mask:
        # Ragged last H-tile: zero rows past the end of the image so garbage
        # in the out-of-bounds part of the block contributes nothing to
        # either sum (the channel-select below then also sees zeros).
        i = pl.program_id(0)
        row = lax.broadcasted_iota(jnp.int32, (1, 1, th, 1), 2)
        pre = jnp.where(row < (h_total - i * th), pre, 0.0)

    tgt = tgt_ref[...]                                      # (N, th, W) int32
    # one_hot(target).permute(0, 3, 1, 2) folded into a broadcast compare:
    # channel c keeps sigmoid(pred) only where target == c.
    c_iota = lax.broadcasted_iota(jnp.int32, (1, nclass, 1, 1), 1)
    inter_tile = jnp.where(tgt[:, None, :, :] == c_iota, pre, 0.0)

    inter_ref[...] = jnp.full(inter_ref.shape, jnp.sum(inter_tile), jnp.float32)
    psum_ref[...] = jnp.full(psum_ref.shape, jnp.sum(pre), jnp.float32)


def _vmem_limit_bytes():
    try:
        cap = int(pltpu.get_tpu_info().vmem_capacity_bytes)
    except Exception:
        cap = 64 * 2**20            # conservative fallback (v7x per-core size)
    # ~96 MiB on v5e/v6e (128 MiB physical), ~48 MiB on v7x (64 MiB per core).
    return max(16 * 2**20, min(cap * 3 // 4, 96 * 2**20))


def _choose_h_tile(n, c, h, w, pred_itemsize, budget):
    """Largest multiple-of-8 row count per step such that the double-buffered
    input blocks plus the f32 elementwise temporaries fit in `budget`."""
    w_lanes = max(_LANE, pl.cdiv(w, _LANE) * _LANE)         # lane padding
    per_row = n * w_lanes * (
        2 * c * pred_itemsize       # double-buffered predict block
        + 2 * 4                     # double-buffered int32 target block
        + 4 * c * 4                 # ~4 f32 full-block elementwise temporaries
    )
    th = max(_SUB, (budget // per_row) // _SUB * _SUB)
    return int(h if th >= h else th)


def dice_loss(predict, target):
    """predict: (N, C, H, W) float logits (any float dtype);
    target: (N, H, W) integer class labels in [0, C)
    (same contract as torch.nn.functional.one_hot — out-of-range labels are
    silently dropped from the intersection instead of raising)."""
    N, C, H, W = predict.shape
    assert target.shape == (N, H, W), "the size of predict and target must be equal."
    target = target.astype(jnp.int32)

    vmem_limit = _vmem_limit_bytes()
    th = _choose_h_tile(N, C, H, W, predict.dtype.itemsize, (vmem_limit * 4) // 5)
    ntiles = int(pl.cdiv(H, th))
    need_mask = (ntiles * th) != H

    kernel = functools.partial(
        _dice_kernel, nclass=C, h_total=H, th=th, need_mask=need_mask)

    inter_p, psum_p = pl.pallas_call(
        kernel,
        out_shape=(
            jax.ShapeDtypeStruct((ntiles, _SUB, _LANE), jnp.float32),
            jax.ShapeDtypeStruct((ntiles, _SUB, _LANE), jnp.float32),
        ),
        grid_spec=pltpu.PrefetchScalarGridSpec(
            num_scalar_prefetch=0,
            grid=(ntiles,),
            in_specs=[
                # Native layouts: full N, C; tile H (sublanes); full W (lanes).
                pl.BlockSpec((N, C, th, W), lambda i: (0, 0, i, 0)),
                pl.BlockSpec((N, th, W), lambda i: (0, i, 0)),
            ],
            out_specs=[
                pl.BlockSpec((1, _SUB, _LANE), lambda i: (i, 0, 0)),
                pl.BlockSpec((1, _SUB, _LANE), lambda i: (i, 0, 0)),
            ],
        ),
        compiler_params=pltpu.CompilerParams(
            # Per-tile partial outputs -> no carried state -> fully parallel.
            # TODO(synk): switch to pltpu.CORE_PARALLEL / pl.core_map if a v7x
            # profile shows plain "parallel" not splitting tiles across both TCs.
            dimension_semantics=("parallel",),
            vmem_limit_bytes=vmem_limit,
        ),
    )(predict, target)

    intersection = jnp.sum(inter_p[:, 0, 0])
    # one_hot(target) sums to exactly 1 per pixel (labels in [0, C)), so
    # sum(pre + tar) == sum(pre) + N*H*W.
    union = jnp.sum(psum_p[:, 0, 0]) + jnp.float32(N * H * W)
    return 1.0 - 2.0 * (intersection + EPS) / (union + EPS)


def dice_loss_ref(predict, target):
    """Pure-JAX reference mirroring the PyTorch forward exactly."""
    nclass = predict.shape[1]
    tar = jax.nn.one_hot(target.astype(jnp.int32), nclass, dtype=jnp.float32)
    tar = jnp.transpose(tar, (0, 3, 1, 2))                  # NHWC -> NCHW
    num = predict.shape[0]
    pre = jax.nn.sigmoid(predict.astype(jnp.float32)).reshape(num, -1)
    tar = tar.reshape(num, -1)
    intersection = (pre * tar).sum(-1).sum()
    union = (pre + tar).sum(-1).sum()
    return 1.0 - 2.0 * (intersection + EPS) / (union + EPS)


if __name__ == "__main__":
    key = jax.random.PRNGKey(0)
    k_pred, k_tgt = jax.random.split(key)

    N, C, H, W = 2, 4, 16, 16
    predict = jax.random.normal(k_pred, (N, C, H, W), dtype=jnp.float32)
    target = jax.random.randint(k_tgt, (N, H, W), 0, C, dtype=jnp.int32)

    score = jax.block_until_ready(dice_loss(predict, target))
    ref = jax.block_until_ready(dice_loss_ref(predict, target))

    assert jnp.allclose(score, ref, rtol=1e-5, atol=1e-5), (score, ref)
    print("KERNEL_OK")
</pallas_src>

<mosaic_0001>
module attributes {stable_mosaic.version = 11 : i64} {
  func.func @_dice_kernel(%arg0: i32, %arg1: memref<2x4x16x16xf32, #tpu.memory_space<vmem>>, %arg2: memref<2x16x16xi32, #tpu.memory_space<vmem>>, %arg3: memref<1x8x128xf32, #tpu.memory_space<vmem>>, %arg4: memref<1x8x128xf32, #tpu.memory_space<vmem>>) attributes {dimension_semantics = [#tpu.dimension_semantics<parallel>], iteration_bounds = array<i64: 1>, scalar_prefetch = 0 : i64, scratch_operands = 0 : i64, tpu.core_type = #tpu.core_type<tc>, window_params = [{transform_indices = @transform_0, window_bounds = array<i64: 2, 4, 16, 16>}, {transform_indices = @transform_1, window_bounds = array<i64: 2, 16, 16>}, {transform_indices = @transform_2, window_bounds = array<i64: 1, 8, 128>}, {transform_indices = @transform_3, window_bounds = array<i64: 1, 8, 128>}]} {
    %c0 = arith.constant 0 : index
    %c0_0 = arith.constant 0 : index
    %c0_1 = arith.constant 0 : index
    %c0_2 = arith.constant 0 : index
    %0 = vector.load %arg1[%c0, %c0_0, %c0_1, %c0_2] : memref<2x4x16x16xf32, #tpu.memory_space<vmem>>, vector<2x4x16x16xf32>
    %cst = arith.constant 5.000000e-01 : f32
    %1 = vector.broadcast %cst : f32 to vector<2x4x16x16xf32>
    %2 = arith.mulf %1, %0 : vector<2x4x16x16xf32>
    %3 = math.tanh %2 : vector<2x4x16x16xf32>
    %cst_3 = arith.constant 1.000000e+00 : f32
    %4 = vector.broadcast %cst_3 : f32 to vector<2x4x16x16xf32>
    %5 = arith.addf %3, %4 : vector<2x4x16x16xf32>
    %cst_4 = arith.constant 5.000000e-01 : f32
    %6 = vector.broadcast %cst_4 : f32 to vector<2x4x16x16xf32>
    %7 = arith.mulf %6, %5 : vector<2x4x16x16xf32>
    %c0_5 = arith.constant 0 : index
    %c0_6 = arith.constant 0 : index
    %c0_7 = arith.constant 0 : index
    %8 = vector.load %arg2[%c0_5, %c0_6, %c0_7] : memref<2x16x16xi32, #tpu.memory_space<vmem>>, vector<2x16x16xi32>
    %9 = tpu.iota {dimensions = array<i32: 1>} : vector<1x4x1x1xi32>
    %10 = vector.shape_cast %8 : vector<2x16x16xi32> to vector<2x1x16x16xi32>
    %11 = vector.broadcast %10 : vector<2x1x16x16xi32> to vector<2x4x16x16xi32>
    %12 = vector.broadcast %9 : vector<1x4x1x1xi32> to vector<2x4x16x16xi32>
    %13 = arith.cmpi eq, %11, %12 : vector<2x4x16x16xi32>
    %cst_8 = arith.constant 0.000000e+00 : f32
    %14 = vector.broadcast %cst_8 : f32 to vector<2x4x16x16xf32>
    %15 = arith.select %13, %7, %14 : vector<2x4x16x16xi1>, vector<2x4x16x16xf32>
    %16 = vector.shape_cast %15 : vector<2x4x16x16xf32> to vector<1x2x4x16x16xf32>
    %cst_9 = arith.constant dense<0.000000e+00> : vector<1xf32>
    %17 = vector.multi_reduction <add>, %16, %cst_9 [1, 2, 3, 4] : vector<1x2x4x16x16xf32> to vector<1xf32>
    %18 = vector.shape_cast %17 : vector<1xf32> to vector<1x1x1x1x1xf32>
    %19 = vector.extract %18[0, 0, 0, 0, 0] : f32 from vector<1x1x1x1x1xf32>
    %20 = vector.broadcast %19 : f32 to vector<1x8x128xf32>
    %c0_10 = arith.constant 0 : index
    %c0_11 = arith.constant 0 : index
    %c0_12 = arith.constant 0 : index
    %21 = vector.load %arg3[%c0_10, %c0_11, %c0_12] : memref<1x8x128xf32, #tpu.memory_space<vmem>>, vector<1x8x128xf32>
    tpu.vector_store %arg3[%c0_10, %c0_11, %c0_12], %20 {strides = array<i32>} : memref<1x8x128xf32, #tpu.memory_space<vmem>>, vector<1x8x128xf32>,
    %22 = vector.shape_cast %7 : vector<2x4x16x16xf32> to vector<1x2x4x16x16xf32>
    %cst_13 = arith.constant dense<0.000000e+00> : vector<1xf32>
    %23 = vector.multi_reduction <add>, %22, %cst_13 [1, 2, 3, 4] : vector<1x2x4x16x16xf32> to vector<1xf32>
    %24 = vector.shape_cast %23 : vector<1xf32> to vector<1x1x1x1x1xf32>
    %25 = vector.extract %24[0, 0, 0, 0, 0] : f32 from vector<1x1x1x1x1xf32>
    %26 = vector.broadcast %25 : f32 to vector<1x8x128xf32>
    %c0_14 = arith.constant 0 : index
    %c0_15 = arith.constant 0 : index
    %c0_16 = arith.constant 0 : index
    %27 = vector.load %arg4[%c0_14, %c0_15, %c0_16] : memref<1x8x128xf32, #tpu.memory_space<vmem>>, vector<1x8x128xf32>
    tpu.vector_store %arg4[%c0_14, %c0_15, %c0_16], %26 {strides = array<i32>} : memref<1x8x128xf32, #tpu.memory_space<vmem>>, vector<1x8x128xf32>,
    return
  }
  func.func @transform_0(%arg0: i32) -> (i32, i32, i32, i32) {
    %c0_i32 = arith.constant 0 : i32
    %c0_i32_0 = arith.constant 0 : i32
    %c0_i32_1 = arith.constant 0 : i32
    %c0_i32_2 = arith.constant 0 : i32
    return %c0_i32, %c0_i32_0, %arg0, %c0_i32_1 : i32, i32, i32, i32
  }
  func.func @transform_1(%arg0: i32) -> (i32, i32, i32) {
    %c0_i32 = arith.constant 0 : i32
    %c0_i32_0 = arith.constant 0 : i32
    %c0_i32_1 = arith.constant 0 : i32
    return %c0_i32, %arg0, %c0_i32_0 : i32, i32, i32
  }
  func.func @transform_2(%arg0: i32) -> (i32, i32, i32) {
    %c0_i32 = arith.constant 0 : i32
    %c0_i32_0 = arith.constant 0 : i32
    %c0_i32_1 = arith.constant 0 : i32
    return %arg0, %c0_i32, %c0_i32_0 : i32, i32, i32
  }
  func.func @transform_3(%arg0: i32) -> (i32, i32, i32) {
    %c0_i32 = arith.constant 0 : i32
    %c0_i32_0 = arith.constant 0 : i32
    %c0_i32_1 = arith.constant 0 : i32
    return %arg0, %c0_i32, %c0_i32_0 : i32, i32, i32
  }
}

</mosaic_0001>

<llo_original>
// kernel: tpu_custom_call.1
$region0: #{tpu_custom_call.1}
  #allocation0 [shape = 'u32[]', space=smem, size = 0x4, offset = 0x4, fixed_abs, tag = 'smem constant byte address 0x4 - core index']
  #allocation1 [shape = 'u32[72,128]{1,0:T(1,128)}', space=vmem, size = 0x9000, scoped, tag = 'internal scratch']
  %s0 = inlined_call_operand.hbm [shape: f32[2,4,16,16], index: 0, kind: input, shape index: {}]
  %s1 = inlined_call_operand.hbm [shape: s32[2,16,16], index: 1, kind: input, shape index: {}]
  %s2 = inlined_call_operand.hbm [shape: f32[1,8,128], index: 2, kind: output, shape index: {0}]
  %s3 = inlined_call_operand.hbm [shape: f32[1,8,128], index: 3, kind: output, shape index: {1}]
  %4 = xla_tuple %s2, %s3
  %s5 = sld [smem:[#allocation0]]
  $region34: #{tpu_custom_call.1} parent=0
    _
  %s7 = ssub.s32 1, %s5
  %s8 = scalar_select 0, %s7, %s5
  $region1: #{tpu_custom_call.1} parent=0
    #allocation2 [shape = 'u8[65536]{0}', space=vmem, size = 0x10000, scoped, tag = 'input window, operand 0, single buffered']
    #allocation3 [shape = 's32[1]{0}', space=sflag, size = 0x4, scoped, tag = 'scoped memory for tpu_custom_call.1']
    #allocation4 [shape = 's32[1]{0}', space=sflag, size = 0x4, scoped, tag = 'scoped memory for tpu_custom_call.1']
    #allocation5 [shape = 'u8[16384]{0}', space=vmem, size = 0x4000, scoped, tag = 'input window, operand 1, single buffered']
    #allocation6 [shape = 's32[1]{0}', space=sflag, size = 0x4, scoped, tag = 'scoped memory for tpu_custom_call.1']
    #allocation7 [shape = 'u8[4096]{0}', space=vmem, size = 0x1000, scoped, tag = 'output window, operand 0, single buffered']
    #allocation8 [shape = 'u8[4096]{0}', space=vmem, size = 0x1000, scoped, tag = 'output window, operand 1, single buffered']
    #allocation9 [shape = 's32[1]{0}', space=sflag, size = 0x4, scoped, tag = 'scoped memory for tpu_custom_call.1']
    %9 = vsyncpa [#allocation3], 0
    %10 = vsyncpa [#allocation6], 0
    %11 = vsyncpa [#allocation4], 0
    %12 = vsyncpa [#allocation9], 0
    // Predicated region
    $region2: #{tpu_custom_call.1} parent=1 // pred_check
      _
    $region3: #{tpu_custom_call.1} parent=1 // pred_check_branch
      %14 = sbr.rel (0) target = $region5
    $region4: #{tpu_custom_call.1} parent=1 // pred_region
      %16 = vsyncadd [#allocation3], 0
      %s17 = sshll.u32 %s0, 4
      %s18 = int_to_ptr.hbm [resolvable:$true] %s17
      %s19 = sshll.u32 [#allocation2], 4
      %s20 = int_to_ptr.vmem [resolvable:$true] %s19
      %25 = dma.hbm_to_vmem [thread:$0]  %s18, 2048, %s20, [#allocation3], 128, 128, 8
    $region5: #{tpu_custom_call.1} parent=1 // pred_fallthru
      _
    // Predicated region
    $region6: #{tpu_custom_call.1} parent=1 // pred_check
      _
    $region7: #{tpu_custom_call.1} parent=1 // pred_check_branch
      %27 = sbr.rel (0) target = $region9
    $region8: #{tpu_custom_call.1} parent=1 // pred_region
      %29 = vsyncadd [#allocation6], 0
      %s30 = sshll.u32 %s1, 4
      %s31 = int_to_ptr.hbm [resolvable:$true] %s30
      %s32 = sshll.u32 [#allocation5], 4
      %s33 = int_to_ptr.vmem [resolvable:$true] %s32
      %38 = dma.hbm_to_vmem [thread:$0]  %s31, 512, %s33, [#allocation6], 128, 128, 8
    $region9: #{tpu_custom_call.1} parent=1 // pred_fallthru
      _
    // Predicated region
    $region10: #{tpu_custom_call.1} parent=1 // pred_check
      _
    $region11: #{tpu_custom_call.1} parent=1 // pred_check_branch
      %40 = sbr.rel (0) target = $region13
    $region12: #{tpu_custom_call.1} parent=1 // pred_region
      %42 = dma.done [#allocation3], 2048
    $region13: #{tpu_custom_call.1} parent=1 // pred_fallthru
      _
    // Predicated region
    $region14: #{tpu_custom_call.1} parent=1 // pred_check
      _
    $region15: #{tpu_custom_call.1} parent=1 // pred_check_branch
      %44 = sbr.rel (0) target = $region17
    $region16: #{tpu_custom_call.1} parent=1 // pred_region
      %46 = dma.done [#allocation6], 512
    $region17: #{tpu_custom_call.1} parent=1 // pred_fallthru
      _
    %v47 = vld [vmem:[#allocation2] sm:$0xff]
    %v48 = vld [vmem:[#allocation2 + $0x8] sm:$0xff]
    %v49 = vld [vmem:[#allocation2 + $0x10] sm:$0xff]
    %v50 = vld [vmem:[#allocation2 + $0x18] sm:$0xff]
    %v51 = vld [vmem:[#allocation2 + $0x20] sm:$0xff]
    %v52 = vld [vmem:[#allocation2 + $0x28] sm:$0xff]
    %v53 = vld [vmem:[#allocation2 + $0x30] sm:$0xff]
    %v54 = vld [vmem:[#allocation2 + $0x38] sm:$0xff]
    %v55 = vld [vmem:[#allocation2 + $0x40] sm:$0xff]
    %v56 = vld [vmem:[#allocation2 + $0x48] sm:$0xff]
    %v57 = vld [vmem:[#allocation2 + $0x50] sm:$0xff]
    %v58 = vld [vmem:[#allocation2 + $0x58] sm:$0xff]
    %v59 = vld [vmem:[#allocation2 + $0x60] sm:$0xff]
    %v60 = vld [vmem:[#allocation2 + $0x68] sm:$0xff]
    %v61 = vld [vmem:[#allocation2 + $0x70] sm:$0xff]
    %v62 = vld [vmem:[#allocation2 + $0x78] sm:$0xff]
    %v63 = vmul.f32 %v47, 0.5
    %v64 = vmul.f32 %v48, 0.5
    %v65 = vmul.f32 %v49, 0.5
    %v66 = vmul.f32 %v50, 0.5
    %v67 = vmul.f32 %v51, 0.5
    %v68 = vmul.f32 %v52, 0.5
    %v69 = vmul.f32 %v53, 0.5
    %v70 = vmul.f32 %v54, 0.5
    %v71 = vmul.f32 %v55, 0.5
    %v72 = vmul.f32 %v56, 0.5
    %v73 = vmul.f32 %v57, 0.5
    %v74 = vmul.f32 %v58, 0.5
    %v75 = vmul.f32 %v59, 0.5
    %v76 = vmul.f32 %v60, 0.5
    %v77 = vmul.f32 %v61, 0.5
    %v78 = vmul.f32 %v62, 0.5
    %v79 = vtanh.pop %v63
    %v80 = vtanh.pop %v64
    %v81 = vtanh.pop %v65
    %v82 = vtanh.pop %v66
    %v83 = vtanh.pop %v67
    %v84 = vtanh.pop %v68
    %v85 = vtanh.pop %v69
    %v86 = vtanh.pop %v70
    %v87 = vtanh.pop %v71
    %v88 = vtanh.pop %v72
    %v89 = vtanh.pop %v73
    %v90 = vtanh.pop %v74
    %v91 = vtanh.pop %v75
    %v92 = vtanh.pop %v76
    %v93 = vtanh.pop %v77
    %v94 = vtanh.pop %v78
    %v95 = vadd.f32 %v79, 1.0
    %v96 = vadd.f32 %v80, 1.0
    %v97 = vadd.f32 %v81, 1.0
    %v98 = vadd.f32 %v82, 1.0
    %v99 = vadd.f32 %v83, 1.0
    %v100 = vadd.f32 %v84, 1.0
    %v101 = vadd.f32 %v85, 1.0
    %v102 = vadd.f32 %v86, 1.0
    %v103 = vadd.f32 %v87, 1.0
    %v104 = vadd.f32 %v88, 1.0
    %v105 = vadd.f32 %v89, 1.0
    %v106 = vadd.f32 %v90, 1.0
    %v107 = vadd.f32 %v91, 1.0
    %v108 = vadd.f32 %v92, 1.0
    %v109 = vadd.f32 %v93, 1.0
    %v110 = vadd.f32 %v94, 1.0
    %v111 = vmul.f32 %v95, 0.5
    %v112 = vmul.f32 %v96, 0.5
    %v113 = vmul.f32 %v97, 0.5
    %v114 = vmul.f32 %v98, 0.5
    %v115 = vmul.f32 %v99, 0.5
    %v116 = vmul.f32 %v100, 0.5
    %v117 = vmul.f32 %v101, 0.5
    %v118 = vmul.f32 %v102, 0.5
    %v119 = vmul.f32 %v103, 0.5
    %v120 = vmul.f32 %v104, 0.5
    %v121 = vmul.f32 %v105, 0.5
    %v122 = vmul.f32 %v106, 0.5
    %v123 = vmul.f32 %v107, 0.5
    %v124 = vmul.f32 %v108, 0.5
    %v125 = vmul.f32 %v109, 0.5
    %v126 = vmul.f32 %v110, 0.5
    %v127 = vld [vmem:[#allocation5] sm:$0xff]
    %v128 = vld [vmem:[#allocation5 + $0x8] sm:$0xff]
    %v129 = vld [vmem:[#allocation5 + $0x10] sm:$0xff]
    %v130 = vld [vmem:[#allocation5 + $0x18] sm:$0xff]
    %vm131 = vcmp.eq.s32.totalorder %v127, 0
    %vm132 = vcmp.eq.s32.totalorder %v128, 0
    %vm133 = vcmp.eq.s32.totalorder %v127, 1
    %vm134 = vcmp.eq.s32.totalorder %v128, 1
    %vm135 = vcmp.eq.s32.totalorder %v127, 2
    %vm136 = vcmp.eq.s32.totalorder %v128, 2
    %vm137 = vcmp.eq.s32.totalorder %v127, 3
    %vm138 = vcmp.eq.s32.totalorder %v128, 3
    %vm139 = vcmp.eq.s32.totalorder %v129, 0
    %vm140 = vcmp.eq.s32.totalorder %v130, 0
    %vm141 = vcmp.eq.s32.totalorder %v129, 1
    %vm142 = vcmp.eq.s32.totalorder %v130, 1
    %vm143 = vcmp.eq.s32.totalorder %v129, 2
    %vm144 = vcmp.eq.s32.totalorder %v130, 2
    %vm145 = vcmp.eq.s32.totalorder %v129, 3
    %vm146 = vcmp.eq.s32.totalorder %v130, 3
    %v147 = vsel %vm131, %v111, 0.0
    %v148 = vsel %vm132, %v112, 0.0
    %v149 = vsel %vm133, %v113, 0.0
    %v150 = vsel %vm134, %v114, 0.0
    %v151 = vsel %vm135, %v115, 0.0
    %v152 = vsel %vm136, %v116, 0.0
    %v153 = vsel %vm137, %v117, 0.0
    %v154 = vsel %vm138, %v118, 0.0
    %v155 = vsel %vm139, %v119, 0.0
    %v156 = vsel %vm140, %v120, 0.0
    %v157 = vsel %vm141, %v121, 0.0
    %v158 = vsel %vm142, %v122, 0.0
    %v159 = vsel %vm143, %v123, 0.0
    %v160 = vsel %vm144, %v124, 0.0
    %v161 = vsel %vm145, %v125, 0.0
    %v162 = vsel %vm146, %v126, 0.0
    %vm163 = vcmask 130048
    %v164 = vsel %vm163, %v147, 0.0
    %v165 = vsel %vm163, %v148, 0.0
    %v166 = vadd.f32 %v164, %v165
    %v167 = vsel %vm163, %v149, 0.0
    %v168 = vadd.f32 %v166, %v167
    %v169 = vsel %vm163, %v150, 0.0
    %v170 = vadd.f32 %v168, %v169
    %v171 = vsel %vm163, %v151, 0.0
    %v172 = vadd.f32 %v170, %v171
    %v173 = vsel %vm163, %v152, 0.0
    %v174 = vadd.f32 %v172, %v173
    %v175 = vsel %vm163, %v153, 0.0
    %v176 = vadd.f32 %v174, %v175
    %v177 = vsel %vm163, %v154, 0.0
    %v178 = vadd.f32 %v176, %v177
    %v179 = vsel %vm163, %v155, 0.0
    %v180 = vadd.f32 %v178, %v179
    %v181 = vsel %vm163, %v156, 0.0
    %v182 = vadd.f32 %v180, %v181
    %v183 = vsel %vm163, %v157, 0.0
    %v184 = vadd.f32 %v182, %v183
    %v185 = vsel %vm163, %v158, 0.0
    %v186 = vadd.f32 %v184, %v185
    %v187 = vsel %vm163, %v159, 0.0
    %v188 = vadd.f32 %v186, %v187
    %v189 = vsel %vm163, %v160, 0.0
    %v190 = vadd.f32 %v188, %v189
    %v191 = vsel %vm163, %v161, 0.0
    %v192 = vadd.f32 %v190, %v191
    %v193 = vsel %vm163, %v162, 0.0
    %v194 = vadd.f32 %v192, %v193
    %195 = vadd.xlane.f32.xlu0 %v194
    %v196 = vpop.xlane.xlu0 %195
    %v197 = vrot.slane %v196, 4
    %v198 = vadd.f32 %v196, %v197
    %v199 = vrot.slane %v198, 2
    %v200 = vadd.f32 %v198, %v199
    %v201 = vrot.slane %v200, 1
    %v202 = vadd.f32 %v200, %v201
    %s203 = vtos %v202
    %v204 = vstv %s203
    %205 = vst [vmem:[#allocation7] sm:$0xff] %v204
    %v206 = vsel %vm163, %v111, 0.0
    %v207 = vsel %vm163, %v112, 0.0
    %v208 = vadd.f32 %v206, %v207
    %v209 = vsel %vm163, %v113, 0.0
    %v210 = vadd.f32 %v208, %v209
    %v211 = vsel %vm163, %v114, 0.0
    %v212 = vadd.f32 %v210, %v211
    %v213 = vsel %vm163, %v115, 0.0
    %v214 = vadd.f32 %v212, %v213
    %v215 = vsel %vm163, %v116, 0.0
    %v216 = vadd.f32 %v214, %v215
    %v217 = vsel %vm163, %v117, 0.0
    %v218 = vadd.f32 %v216, %v217
    %v219 = vsel %vm163, %v118, 0.0
    %v220 = vadd.f32 %v218, %v219
    %v221 = vsel %vm163, %v119, 0.0
    %v222 = vadd.f32 %v220, %v221
    %v223 = vsel %vm163, %v120, 0.0
    %v224 = vadd.f32 %v222, %v223
    %v225 = vsel %vm163, %v121, 0.0
    %v226 = vadd.f32 %v224, %v225
    %v227 = vsel %vm163, %v122, 0.0
    %v228 = vadd.f32 %v226, %v227
    %v229 = vsel %vm163, %v123, 0.0
    %v230 = vadd.f32 %v228, %v229
    %v231 = vsel %vm163, %v124, 0.0
    %v232 = vadd.f32 %v230, %v231
    %v233 = vsel %vm163, %v125, 0.0
    %v234 = vadd.f32 %v232, %v233
    %v235 = vsel %vm163, %v126, 0.0
    %v236 = vadd.f32 %v234, %v235
    %237 = vadd.xlane.f32.xlu0 %v236
    %v238 = vpop.xlane.xlu0 %237
    %v239 = vrot.slane %v238, 4
    %v240 = vadd.f32 %v238, %v239
    %v241 = vrot.slane %v240, 2
    %v242 = vadd.f32 %v240, %v241
    %v243 = vrot.slane %v242, 1
    %v244 = vadd.f32 %v242, %v243
    %s245 = vtos %v244
    %v246 = vstv %s245
    %247 = vst [vmem:[#allocation8] sm:$0xff] %v246
    // Predicated region
    $region18: #{tpu_custom_call.1} parent=1 // pred_check
      _
    $region19: #{tpu_custom_call.1} parent=1 // pred_check_branch
      %249 = sbr.rel (0) target = $region21
    $region20: #{tpu_custom_call.1} parent=1 // pred_region
      %251 = vsyncadd [#allocation4], 0
      %s253 = sshll.u32 [#allocation7], 4
      %s254 = int_to_ptr.vmem [resolvable:$true] %s253
      %s255 = sshll.u32 %s2, 4
      %s256 = int_to_ptr.hbm [resolvable:$true] %s255
      %258 = dma.vmem_to_hbm [thread:$0]  %s254, 128, %s256, [#allocation4]
    $region21: #{tpu_custom_call.1} parent=1 // pred_fallthru
      _
    // Predicated region
    $region22: #{tpu_custom_call.1} parent=1 // pred_check
      _
    $region23: #{tpu_custom_call.1} parent=1 // pred_check_branch
      %260 = sbr.rel (0) target = $region25
    $region24: #{tpu_custom_call.1} parent=1 // pred_region
      %262 = vsyncadd [#allocation9], 0
      %s264 = sshll.u32 [#allocation8], 4
      %s265 = int_to_ptr.vmem [resolvable:$true] %s264
      %s266 = sshll.u32 %s3, 4
      %s267 = int_to_ptr.hbm [resolvable:$true] %s266
      %269 = dma.vmem_to_hbm [thread:$0]  %s265, 128, %s267, [#allocation9]
    $region25: #{tpu_custom_call.1} parent=1 // pred_fallthru
      _
    // Predicated region
    $region26: #{tpu_custom_call.1} parent=1 // pred_check
      _
    $region27: #{tpu_custom_call.1} parent=1 // pred_check_branch
      %271 = sbr.rel (0) target = $region29
    $region28: #{tpu_custom_call.1} parent=1 // pred_region
      %273 = dma.done [#allocation4], 128
    $region29: #{tpu_custom_call.1} parent=1 // pred_fallthru
      _
    // Predicated region
    $region30: #{tpu_custom_call.1} parent=1 // pred_check
      _
    $region31: #{tpu_custom_call.1} parent=1 // pred_check_branch
      %275 = sbr.rel (0) target = $region33
    $region32: #{tpu_custom_call.1} parent=1 // pred_region
      %277 = dma.done [#allocation9], 128
    $region33: #{tpu_custom_call.1} parent=1 // pred_fallthru
      _
    %278 = vsyncpa [#allocation3], 1
    %279 = vsyncpa [#allocation6], 1
    %280 = vsyncpa [#allocation4], 1
    %281 = vsyncpa [#allocation9], 1

</llo_original>
